<compile_context>
chip_gen: v5e
topology: v5e:2x2
jax: 0.10.0
libtpu: 0.0.40
codegen_flags: <defaults>
</compile_context>

<pallas_src>
import jax
import jax.numpy as jnp
from jax.experimental import pallas as pl
from jax.experimental.pallas import tpu as pltpu

N_IN = 28 * 28     # 784
H1 = 128
H2 = 64
H2_PAD = 128       # lane-dense padded hidden-2 width (zero-extended, exact)
N_OUT = 10
N_OUT_PAD = 128    # lane-dense padded output width (zero-extended, exact)


def _round_up(n, m):
    return ((n + m - 1) // m) * m


def _device_budget():
    """Per-generation (batch-tile cap, vmem_limit_bytes)."""
    try:
        kind = jax.devices()[0].device_kind.lower()
    except Exception:
        kind = ""
    if "v7" in kind or "7x" in kind:
        # 64 MiB VMEM per TensorCore on v7x: keep the working set ~<45 MiB.
        return 4096, 56 << 20
    if any(v in kind for v in ("v6", "v5", "v4")):
        # 128 MiB physical VMEM; raise the scoped limit well past the default.
        return 8192, 100 << 20
    # Unknown chip: stay small and use the compiler's default VMEM limit.
    return 1024, None


def _choose_tb(B, cap):
    """Batch tile: multiple of 16 (bf16 sublane packing), derived from B so
    the grid has >=2 steps whenever B is big enough (v7x megacore split) and
    awkward batch sizes don't pad a whole extra tile."""
    if B <= 2 * cap:
        tiles = 2 if B > 16 else 1
        return max(16, _round_up(pl.cdiv(B, tiles), 16))
    return cap


def _mlp_bn_kernel(x_ref, w1_ref, c1_ref, w2_ref, c2_ref, w3_ref, b3_ref, o_ref):
    # Cast the x tile to bf16 in-kernel (no wrapper-side pad/cast pass).
    x = x_ref[...].astype(jnp.bfloat16)                         # (TB, 784)

    # Layer 1: Linear(784->128) with BN folded in, + ReLU.  (Dropout = id.)
    h1 = jnp.dot(x, w1_ref[...], preferred_element_type=jnp.float32) + c1_ref[...]
    h1 = jnp.maximum(h1, 0.0).astype(jnp.bfloat16)              # (TB, 128)

    # Layer 2: Linear(128->64, padded to 128) with BN folded in, + ReLU.
    # Padded columns are relu(0 + 0) = 0 exactly.
    h2 = jnp.dot(h1, w2_ref[...], preferred_element_type=jnp.float32) + c2_ref[...]
    h2 = jnp.maximum(h2, 0.0).astype(jnp.bfloat16)              # (TB, 128)

    # Layer 3: Linear(64->10, padded to 128x128); columns 10..127 are exact 0.
    o_ref[...] = (jnp.dot(h2, w3_ref[...], preferred_element_type=jnp.float32)
                  + b3_ref[...]).astype(o_ref.dtype)            # (TB, 128) bf16


def prepare_params(params, eps=1e-5):
    """One-time fold of eval-mode BatchNorm into weights + transpose/pad/cast."""
    (w1, b1, g1, be1, rm1, rv1,
     w2, b2, g2, be2, rm2, rv2,
     w3, b3) = params

    # Eval-mode BN:  y = (x - rm) / sqrt(rv+eps) * g + be  =  x*s + t
    s1 = g1 / jnp.sqrt(rv1 + eps)
    t1 = be1 - rm1 * s1
    s2 = g2 / jnp.sqrt(rv2 + eps)
    t2 = be2 - rm2 * s2

    # Fold scale into (in, out)-layout weight columns, shift into the bias.
    w1f = (w1.T * s1[None, :]).astype(jnp.bfloat16)                  # (784, 128)
    c1 = (b1 * s1 + t1).reshape(1, -1).astype(jnp.float32)           # (1, 128)

    # Lane-dense pad of hidden-2 (64 -> 128).  Zero weight columns / zero bias
    # give relu(0)=0 in the padded slots; zero rows of w3p then contribute
    # nothing, so the fold is numerically exact.
    w2f = w2.T * s2[None, :]                                         # (128, 64)
    c2v = b2 * s2 + t2                                               # (64,)
    w2p = (jnp.zeros((H1, H2_PAD), jnp.float32)
           .at[:, :H2].set(w2f).astype(jnp.bfloat16))                # (128, 128)
    c2p = jnp.zeros((1, H2_PAD), jnp.float32).at[0, :H2].set(c2v)    # (1, 128)

    # Pad fc3 to a lane-dense 128x128 (zero rows/columns are exact).
    w3p = (jnp.zeros((H2_PAD, N_OUT_PAD), jnp.float32)
           .at[:H2, :N_OUT].set(w3.T).astype(jnp.bfloat16))          # (128, 128)
    b3p = jnp.zeros((1, N_OUT_PAD), jnp.float32).at[0, :N_OUT].set(b3)

    return (w1f, c1, w2p, c2p, w3p, b3p)


def neural_net_with_batchnorm(x, prep, tb=None):
    """x: (B, 1, 28, 28) (or anything reshapeable to (-1, 784)), any float dtype.

    prep: output of prepare_params(params) — precomputed once, not per call.
    Returns (B, 10) float32 logits (eval-mode semantics).
    """
    w1f, c1, w2p, c2p, w3p, b3p = prep

    x2d = x.reshape(-1, N_IN)     # free (contiguous) reshape, no copy/cast
    B = x2d.shape[0]

    if tb is None:
        cap, vmem_limit = _device_budget()
    else:
        cap, vmem_limit = tb, 100 << 20
    TB = _choose_tb(B, cap)
    grid = (pl.cdiv(B, TB),)      # ragged: no host padding, OOB writes masked

    const = lambda i: (0, 0)      # weights/bias stay resident across grid steps
    out = pl.pallas_call(
        _mlp_bn_kernel,
        out_shape=jax.ShapeDtypeStruct((B, N_OUT_PAD), jnp.bfloat16),
        grid=grid,
        in_specs=[
            # x tile, pipelined (double-buffered).  On v7x, pipeline_mode=
            # pl.Buffered(3) here is a candidate sweep once TB is tuned.
            pl.BlockSpec((TB, N_IN), lambda i: (i, 0)),
            pl.BlockSpec((N_IN, H1), const),               # w1 (BN folded)
            pl.BlockSpec((1, H1), const),                  # bias/shift 1
            pl.BlockSpec((H1, H2_PAD), const),             # w2 (BN folded, padded)
            pl.BlockSpec((1, H2_PAD), const),              # bias/shift 2 (padded)
            pl.BlockSpec((H2_PAD, N_OUT_PAD), const),      # w3 (padded)
            pl.BlockSpec((1, N_OUT_PAD), const),           # b3 (padded)
        ],
        out_specs=pl.BlockSpec((TB, N_OUT_PAD), lambda i: (i, 0)),
        compiler_params=pltpu.CompilerParams(
            dimension_semantics=("parallel",),             # megacore on v7x
            vmem_limit_bytes=vmem_limit),
    )(x2d, w1f, c1, w2p, c2p, w3p, b3p)

    # Slice the lane-dense bf16 slab (cols 10..127 are exact zeros) and cast to
    # the module's f32 output dtype; under jit this fuses into one tiny op.
    return out[:, :N_OUT].astype(jnp.float32)


def init_params(key):
    """Deterministic parameter init matching the PyTorch module's shapes."""
    ks = jax.random.split(key, 6)

    def linear(kw, kb, out_f, in_f):
        bound = 1.0 / jnp.sqrt(in_f)
        w = jax.random.uniform(kw, (out_f, in_f), jnp.float32, -bound, bound)
        b = jax.random.uniform(kb, (out_f,), jnp.float32, -bound, bound)
        return w, b

    w1, b1 = linear(ks[0], ks[1], 128, 784)
    w2, b2 = linear(ks[2], ks[3], 64, 128)
    w3, b3 = linear(ks[4], ks[5], 10, 64)

    # BatchNorm1d params: gamma=1, beta=0, running_mean=0, running_var=1.
    g1, be1 = jnp.ones((128,), jnp.float32), jnp.zeros((128,), jnp.float32)
    rm1, rv1 = jnp.zeros((128,), jnp.float32), jnp.ones((128,), jnp.float32)
    g2, be2 = jnp.ones((64,), jnp.float32), jnp.zeros((64,), jnp.float32)
    rm2, rv2 = jnp.zeros((64,), jnp.float32), jnp.ones((64,), jnp.float32)

    return (w1, b1, g1, be1, rm1, rv1,
            w2, b2, g2, be2, rm2, rv2,
            w3, b3)


if __name__ == "__main__":
    key = jax.random.PRNGKey(0)
    k_params, k_x = jax.random.split(key)
    params = init_params(k_params)
    prep = prepare_params(params)   # one-time fold/transpose/pad/cast

    # Small MNIST-like input: batch=32, NCHW (32, 1, 28, 28) -> grid of 2 tiles.
    B = 32
    x = jax.random.normal(k_x, (B, 1, 28, 28), dtype=jnp.float32)

    fwd = jax.jit(neural_net_with_batchnorm)
    y = fwd(x, prep)
    jax.block_until_ready(y)
    assert y.shape == (B, N_OUT) and y.dtype == jnp.float32

    # Reference check in plain float32 JAX (same eval-mode semantics).  The
    # kernel uses bf16 weights/activations/output with f32 accumulation, so
    # compare with a bf16-appropriate tolerance.
    (w1, b1, g1, be1, rm1, rv1,
     w2, b2, g2, be2, rm2, rv2,
     w3, b3) = params
    eps = 1e-5
    xr = x.reshape(-1, 784)
    h = jnp.maximum((xr @ w1.T + b1 - rm1) / jnp.sqrt(rv1 + eps) * g1 + be1, 0.0)
    h = jnp.maximum((h @ w2.T + b2 - rm2) / jnp.sqrt(rv2 + eps) * g2 + be2, 0.0)
    y_ref = h @ w3.T + b3
    err = float(jnp.max(jnp.abs(y - y_ref)))
    assert jnp.allclose(y, y_ref, atol=3e-2, rtol=3e-2), err

    print("KERNEL_OK")
</pallas_src>

<mosaic_0001>
module attributes {stable_mosaic.version = 11 : i64} {
  func.func @_mlp_bn_kernel(%arg0: i32, %arg1: memref<16x784xf32, #tpu.memory_space<vmem>>, %arg2: memref<784x128xbf16, #tpu.memory_space<vmem>>, %arg3: memref<1x128xf32, #tpu.memory_space<vmem>>, %arg4: memref<128x128xbf16, #tpu.memory_space<vmem>>, %arg5: memref<1x128xf32, #tpu.memory_space<vmem>>, %arg6: memref<128x128xbf16, #tpu.memory_space<vmem>>, %arg7: memref<1x128xf32, #tpu.memory_space<vmem>>, %arg8: memref<16x128xbf16, #tpu.memory_space<vmem>>) attributes {dimension_semantics = [#tpu.dimension_semantics<parallel>], iteration_bounds = array<i64: 2>, scalar_prefetch = 0 : i64, scratch_operands = 0 : i64, tpu.core_type = #tpu.core_type<tc>, window_params = [{transform_indices = @transform_0, window_bounds = array<i64: 16, 784>}, {pipeline_mode = #tpu.pipeline_mode<synchronous>, transform_indices = @transform_1, window_bounds = array<i64: 784, 128>}, {pipeline_mode = #tpu.pipeline_mode<synchronous>, transform_indices = @transform_2, window_bounds = array<i64: 1, 128>}, {pipeline_mode = #tpu.pipeline_mode<synchronous>, transform_indices = @transform_3, window_bounds = array<i64: 128, 128>}, {pipeline_mode = #tpu.pipeline_mode<synchronous>, transform_indices = @transform_4, window_bounds = array<i64: 1, 128>}, {pipeline_mode = #tpu.pipeline_mode<synchronous>, transform_indices = @transform_5, window_bounds = array<i64: 128, 128>}, {pipeline_mode = #tpu.pipeline_mode<synchronous>, transform_indices = @transform_6, window_bounds = array<i64: 1, 128>}, {transform_indices = @transform_7, window_bounds = array<i64: 16, 128>}]} {
    %c0 = arith.constant 0 : index
    %c0_0 = arith.constant 0 : index
    %0 = vector.load %arg1[%c0, %c0_0] : memref<16x784xf32, #tpu.memory_space<vmem>>, vector<16x784xf32>
    %1 = arith.truncf %0 : vector<16x784xf32> to vector<16x784xbf16>
    %c0_1 = arith.constant 0 : index
    %c0_2 = arith.constant 0 : index
    %2 = vector.load %arg2[%c0_1, %c0_2] : memref<784x128xbf16, #tpu.memory_space<vmem>>, vector<784x128xbf16>
    %cst = arith.constant dense<0.000000e+00> : vector<16x128xf32>
    %3 = tpu.matmul %1, %2, %cst {dimension_numbers = #tpu.dot_dimension_numbers<[1], [0], [0], [1], [0, 0, 1, 1], [], []>} : vector<16x784xbf16>, vector<784x128xbf16>, vector<16x128xf32> -> vector<16x128xf32>
    %c0_3 = arith.constant 0 : index
    %c0_4 = arith.constant 0 : index
    %4 = vector.load %arg3[%c0_3, %c0_4] : memref<1x128xf32, #tpu.memory_space<vmem>>, vector<1x128xf32>
    %5 = vector.broadcast %4 : vector<1x128xf32> to vector<16x128xf32>
    %6 = arith.addf %3, %5 : vector<16x128xf32>
    %cst_5 = arith.constant 0.000000e+00 : f32
    %7 = vector.broadcast %cst_5 : f32 to vector<16x128xf32>
    %8 = arith.maximumf %6, %7 : vector<16x128xf32>
    %9 = arith.truncf %8 : vector<16x128xf32> to vector<16x128xbf16>
    %c0_6 = arith.constant 0 : index
    %c0_7 = arith.constant 0 : index
    %10 = vector.load %arg4[%c0_6, %c0_7] : memref<128x128xbf16, #tpu.memory_space<vmem>>, vector<128x128xbf16>
    %cst_8 = arith.constant dense<0.000000e+00> : vector<16x128xf32>
    %11 = tpu.matmul %9, %10, %cst_8 {dimension_numbers = #tpu.dot_dimension_numbers<[1], [0], [0], [1], [0, 0, 1, 1], [], []>} : vector<16x128xbf16>, vector<128x128xbf16>, vector<16x128xf32> -> vector<16x128xf32>
    %c0_9 = arith.constant 0 : index
    %c0_10 = arith.constant 0 : index
    %12 = vector.load %arg5[%c0_9, %c0_10] : memref<1x128xf32, #tpu.memory_space<vmem>>, vector<1x128xf32>
    %13 = vector.broadcast %12 : vector<1x128xf32> to vector<16x128xf32>
    %14 = arith.addf %11, %13 : vector<16x128xf32>
    %cst_11 = arith.constant 0.000000e+00 : f32
    %15 = vector.broadcast %cst_11 : f32 to vector<16x128xf32>
    %16 = arith.maximumf %14, %15 : vector<16x128xf32>
    %17 = arith.truncf %16 : vector<16x128xf32> to vector<16x128xbf16>
    %c0_12 = arith.constant 0 : index
    %c0_13 = arith.constant 0 : index
    %18 = vector.load %arg6[%c0_12, %c0_13] : memref<128x128xbf16, #tpu.memory_space<vmem>>, vector<128x128xbf16>
    %cst_14 = arith.constant dense<0.000000e+00> : vector<16x128xf32>
    %19 = tpu.matmul %17, %18, %cst_14 {dimension_numbers = #tpu.dot_dimension_numbers<[1], [0], [0], [1], [0, 0, 1, 1], [], []>} : vector<16x128xbf16>, vector<128x128xbf16>, vector<16x128xf32> -> vector<16x128xf32>
    %c0_15 = arith.constant 0 : index
    %c0_16 = arith.constant 0 : index
    %20 = vector.load %arg7[%c0_15, %c0_16] : memref<1x128xf32, #tpu.memory_space<vmem>>, vector<1x128xf32>
    %21 = vector.broadcast %20 : vector<1x128xf32> to vector<16x128xf32>
    %22 = arith.addf %19, %21 : vector<16x128xf32>
    %23 = arith.truncf %22 : vector<16x128xf32> to vector<16x128xbf16>
    %c0_17 = arith.constant 0 : index
    %c0_18 = arith.constant 0 : index
    %24 = vector.load %arg8[%c0_17, %c0_18] : memref<16x128xbf16, #tpu.memory_space<vmem>>, vector<16x128xbf16>
    tpu.vector_store %arg8[%c0_17, %c0_18], %23 {strides = array<i32>} : memref<16x128xbf16, #tpu.memory_space<vmem>>, vector<16x128xbf16>,
    return
  }
  func.func @transform_0(%arg0: i32) -> (i32, i32) {
    %c0_i32 = arith.constant 0 : i32
    %c0_i32_0 = arith.constant 0 : i32
    return %arg0, %c0_i32 : i32, i32
  }
  func.func @transform_1(%arg0: i32) -> (i32, i32) {
    %c0_i32 = arith.constant 0 : i32
    %c0_i32_0 = arith.constant 0 : i32
    %c0_i32_1 = arith.constant 0 : i32
    return %c0_i32, %c0_i32_0 : i32, i32
  }
  func.func @transform_2(%arg0: i32) -> (i32, i32) {
    %c0_i32 = arith.constant 0 : i32
    %c0_i32_0 = arith.constant 0 : i32
    %c0_i32_1 = arith.constant 0 : i32
    return %c0_i32, %c0_i32_0 : i32, i32
  }
  func.func @transform_3(%arg0: i32) -> (i32, i32) {
    %c0_i32 = arith.constant 0 : i32
    %c0_i32_0 = arith.constant 0 : i32
    %c0_i32_1 = arith.constant 0 : i32
    return %c0_i32, %c0_i32_0 : i32, i32
  }
  func.func @transform_4(%arg0: i32) -> (i32, i32) {
    %c0_i32 = arith.constant 0 : i32
    %c0_i32_0 = arith.constant 0 : i32
    %c0_i32_1 = arith.constant 0 : i32
    return %c0_i32, %c0_i32_0 : i32, i32
  }
  func.func @transform_5(%arg0: i32) -> (i32, i32) {
    %c0_i32 = arith.constant 0 : i32
    %c0_i32_0 = arith.constant 0 : i32
    %c0_i32_1 = arith.constant 0 : i32
    return %c0_i32, %c0_i32_0 : i32, i32
  }
  func.func @transform_6(%arg0: i32) -> (i32, i32) {
    %c0_i32 = arith.constant 0 : i32
    %c0_i32_0 = arith.constant 0 : i32
    %c0_i32_1 = arith.constant 0 : i32
    return %c0_i32, %c0_i32_0 : i32, i32
  }
  func.func @transform_7(%arg0: i32) -> (i32, i32) {
    %c0_i32 = arith.constant 0 : i32
    %c0_i32_0 = arith.constant 0 : i32
    return %arg0, %c0_i32 : i32, i32
  }
}

</mosaic_0001>

<llo_original>
// kernel: neural_net_with_batchnorm.1
$region0: #{neural_net_with_batchnorm.1}
  #allocation0 [shape = 'u32[]', space=smem, size = 0x4, offset = 0x4, fixed_abs, tag = 'smem constant byte address 0x4 - core index']
  #allocation1 [shape = 'u32[72,128]{1,0:T(1,128)}', space=vmem, size = 0x9000, scoped, tag = 'internal scratch']
  %s0 = inlined_call_operand.vmem [shape: f32[32,784], index: 0, kind: input, shape index: {}]
  %s1 = inlined_call_operand.vmem [shape: bf16[784,128], index: 1, kind: input, shape index: {}]
  %s2 = inlined_call_operand.vmem [shape: f32[1,128], index: 2, kind: input, shape index: {}]
  %s3 = inlined_call_operand.vmem [shape: bf16[128,128], index: 3, kind: input, shape index: {}]
  %s4 = inlined_call_operand.vmem [shape: f32[1,128], index: 4, kind: input, shape index: {}]
  %s5 = inlined_call_operand.vmem [shape: bf16[128,128], index: 5, kind: input, shape index: {}]
  %s6 = inlined_call_operand.vmem [shape: f32[1,128], index: 6, kind: input, shape index: {}]
  %s7 = inlined_call_operand.vmem [shape: bf16[32,128], index: 7, kind: output, shape index: {}]
  %s8 = sld [smem:[#allocation0]]
  $region61: #{neural_net_with_batchnorm.1} parent=0
    _
  %s10 = ssub.s32 1, %s8
  %s11 = scalar_select 0, %s10, %s8
  loop: start=0, step=1, limit=4
  $region2: #{neural_net_with_batchnorm.1} parent=0 // loop_pre_header
    _
  $region3: #{neural_net_with_batchnorm.1} parent=0 // loop_header
    %s13 = sphi 0, %s17
    %p14 = scmp.ge.s32.totalorder %s13, 4
    %s23 = sphi 0, %s25
    %s26 = sphi 0, %s23
    %s27 = sphi 0, %s26
    %s43 = sphi 0, %s27
    %s47 = sphi 0, %s47
    %s49 = sphi 0, %s47
    %s50 = sphi 0, %s49
    %s64 = sphi 0, %s50
    %s68 = sphi 0, %s68
    %s70 = sphi 0, %s68
    %s71 = sphi 0, %s70
    %s85 = sphi 0, %s71
    %s89 = sphi 0, %s89
    %s91 = sphi 0, %s89
    %s92 = sphi 0, %s91
    %s106 = sphi 0, %s92
    %s110 = sphi 0, %s110
    %s112 = sphi 0, %s110
    %s113 = sphi 0, %s112
    %s127 = sphi 0, %s113
    %s131 = sphi 0, %s131
    %s133 = sphi 0, %s131
    %s134 = sphi 0, %s133
    %s148 = sphi 0, %s134
    %s152 = sphi 0, %s152
    %s154 = sphi 0, %s152
    %s155 = sphi 0, %s154
    %s169 = sphi 0, %s155
    %s175 = sphi 0, %s177
    %s178 = sphi 0, %s175
    %s179 = sphi 0, %s178
    %s195 = sphi 0, %s179
  $region4: #{neural_net_with_batchnorm.1} parent=0 // loop_header_branch
    %16 = sbr.rel (%p14) target = $region8
  $region5: #{neural_net_with_batchnorm.1} parent=0 // loop_body
    %s18 = ssub.s32 %s13, 1
    %s19 = ssub.s32 %s13, 2
    %s20 = sadd.s32 %s13, 1
    %s21 = ssub.s32 %s13, %s20
    %p22 = scmp.eq.s32.totalorder %s21, 0
    %s24 = sadd.s32 %s23, 1
    %s25 = scalar_select %p22, %s23, %s24
    %p28 = pneg %p22
    %p29 = scmp.eq.s32.totalorder %s13, 1
    %p30 = por %p28, %p29
    %p31 = scmp.ne.s32.totalorder %s23, %s26
    %p32 = scmp.eq.s32.totalorder %s13, 0
    %p33 = por %p31, %p32
    %p34 = scmp.ne.s32.totalorder %s23, %s26
    %p35 = scmp.eq.s32.totalorder %s18, 1
    %p36 = por %p34, %p35
    %p37 = scmp.ne.s32.totalorder %s26, %s27
    %p38 = scmp.eq.s32.totalorder %s18, 0
    %p39 = por %p37, %p38
    %p40 = scmp.ne.s32.totalorder %s26, %s27
    %p41 = scmp.eq.s32.totalorder %s19, 1
    %p42 = por %p40, %p41
    %p44 = scmp.ne.s32.totalorder %s27, %s43
    %p45 = scmp.eq.s32.totalorder %s19, 0
    %p46 = por %p44, %p45
    %s48 = sadd.s32 %s47, 1
    %p51 = scmp.eq.s32.totalorder %s13, 1
    %p52 = scmp.ne.s32.totalorder %s47, %s49
    %p53 = scmp.eq.s32.totalorder %s13, 0
    %p54 = por %p52, %p53
    %p55 = scmp.ne.s32.totalorder %s47, %s49
    %p56 = scmp.eq.s32.totalorder %s18, 1
    %p57 = por %p55, %p56
    %p58 = scmp.ne.s32.totalorder %s49, %s50
    %p59 = scmp.eq.s32.totalorder %s18, 0
    %p60 = por %p58, %p59
    %p61 = scmp.ne.s32.totalorder %s49, %s50
    %p62 = scmp.eq.s32.totalorder %s19, 1
    %p63 = por %p61, %p62
    %p65 = scmp.ne.s32.totalorder %s50, %s64
    %p66 = scmp.eq.s32.totalorder %s19, 0
    %p67 = por %p65, %p66
    %s69 = sadd.s32 %s68, 1
    %p72 = scmp.eq.s32.totalorder %s13, 1
    %p73 = scmp.ne.s32.totalorder %s68, %s70
    %p74 = scmp.eq.s32.totalorder %s13, 0
    %p75 = por %p73, %p74
    %p76 = scmp.ne.s32.totalorder %s68, %s70
    %p77 = scmp.eq.s32.totalorder %s18, 1
    %p78 = por %p76, %p77
    %p79 = scmp.ne.s32.totalorder %s70, %s71
    %p80 = scmp.eq.s32.totalorder %s18, 0
    %p81 = por %p79, %p80
    %p82 = scmp.ne.s32.totalorder %s70, %s71
    %p83 = scmp.eq.s32.totalorder %s19, 1
    %p84 = por %p82, %p83
    %p86 = scmp.ne.s32.totalorder %s71, %s85
    %p87 = scmp.eq.s32.totalorder %s19, 0
    %p88 = por %p86, %p87
    %s90 = sadd.s32 %s89, 1
    %p93 = scmp.eq.s32.totalorder %s13, 1
    %p94 = scmp.ne.s32.totalorder %s89, %s91
    %p95 = scmp.eq.s32.totalorder %s13, 0
    %p96 = por %p94, %p95
    %p97 = scmp.ne.s32.totalorder %s89, %s91
    %p98 = scmp.eq.s32.totalorder %s18, 1
    %p99 = por %p97, %p98
    %p100 = scmp.ne.s32.totalorder %s91, %s92
    %p101 = scmp.eq.s32.totalorder %s18, 0
    %p102 = por %p100, %p101
    %p103 = scmp.ne.s32.totalorder %s91, %s92
    %p104 = scmp.eq.s32.totalorder %s19, 1
    %p105 = por %p103, %p104
    %p107 = scmp.ne.s32.totalorder %s92, %s106
    %p108 = scmp.eq.s32.totalorder %s19, 0
    %p109 = por %p107, %p108
    %s111 = sadd.s32 %s110, 1
    %p114 = scmp.eq.s32.totalorder %s13, 1
    %p115 = scmp.ne.s32.totalorder %s110, %s112
    %p116 = scmp.eq.s32.totalorder %s13, 0
    %p117 = por %p115, %p116
    %p118 = scmp.ne.s32.totalorder %s110, %s112
    %p119 = scmp.eq.s32.totalorder %s18, 1
    %p120 = por %p118, %p119
    %p121 = scmp.ne.s32.totalorder %s112, %s113
    %p122 = scmp.eq.s32.totalorder %s18, 0
    %p123 = por %p121, %p122
    %p124 = scmp.ne.s32.totalorder %s112, %s113
    %p125 = scmp.eq.s32.totalorder %s19, 1
    %p126 = por %p124, %p125
    %p128 = scmp.ne.s32.totalorder %s113, %s127
    %p129 = scmp.eq.s32.totalorder %s19, 0
    %p130 = por %p128, %p129
    %s132 = sadd.s32 %s131, 1
    %p135 = scmp.eq.s32.totalorder %s13, 1
    %p136 = scmp.ne.s32.totalorder %s131, %s133
    %p137 = scmp.eq.s32.totalorder %s13, 0
    %p138 = por %p136, %p137
    %p139 = scmp.ne.s32.totalorder %s131, %s133
    %p140 = scmp.eq.s32.totalorder %s18, 1
    %p141 = por %p139, %p140
    %p142 = scmp.ne.s32.totalorder %s133, %s134
    %p143 = scmp.eq.s32.totalorder %s18, 0
    %p144 = por %p142, %p143
    %p145 = scmp.ne.s32.totalorder %s133, %s134
    %p146 = scmp.eq.s32.totalorder %s19, 1
    %p147 = por %p145, %p146
    %p149 = scmp.ne.s32.totalorder %s134, %s148
    %p150 = scmp.eq.s32.totalorder %s19, 0
    %p151 = por %p149, %p150
    %s153 = sadd.s32 %s152, 1
    %p156 = scmp.eq.s32.totalorder %s13, 1
    %p157 = scmp.ne.s32.totalorder %s152, %s154
    %p158 = scmp.eq.s32.totalorder %s13, 0
    %p159 = por %p157, %p158
    %p160 = scmp.ne.s32.totalorder %s152, %s154
    %p161 = scmp.eq.s32.totalorder %s18, 1
    %p162 = por %p160, %p161
    %p163 = scmp.ne.s32.totalorder %s154, %s155
    %p164 = scmp.eq.s32.totalorder %s18, 0
    %p165 = por %p163, %p164
    %p166 = scmp.ne.s32.totalorder %s154, %s155
    %p167 = scmp.eq.s32.totalorder %s19, 1
    %p168 = por %p166, %p167
    %p170 = scmp.ne.s32.totalorder %s155, %s169
    %p171 = scmp.eq.s32.totalorder %s19, 0
    %p172 = por %p170, %p171
    %s173 = ssub.s32 %s13, %s20
    %p174 = scmp.eq.s32.totalorder %s173, 0
    %s176 = sadd.s32 %s175, 1
    %s177 = scalar_select %p174, %s175, %s176
    %p180 = pneg %p174
    %p181 = scmp.eq.s32.totalorder %s13, 1
    %p182 = por %p180, %p181
    %p183 = scmp.ne.s32.totalorder %s175, %s178
    %p184 = scmp.eq.s32.totalorder %s13, 0
    %p185 = por %p183, %p184
    %p186 = scmp.ne.s32.totalorder %s175, %s178
    %p187 = scmp.eq.s32.totalorder %s18, 1
    %p188 = por %p186, %p187
    %p189 = scmp.ne.s32.totalorder %s178, %s179
    %p190 = scmp.eq.s32.totalorder %s18, 0
    %p191 = por %p189, %p190
    %p192 = scmp.ne.s32.totalorder %s178, %s179
    %p193 = scmp.eq.s32.totalorder %s19, 1
    %p194 = por %p192, %p193
    %p196 = scmp.ne.s32.totalorder %s179, %s195
    %p197 = scmp.eq.s32.totalorder %s19, 0
    %p198 = por %p196, %p197
    %p199 = scmp.le.s32.totalorder 1, %s13
    %p200 = scmp.lt.s32.totalorder %s13, 3
    %p201 = pnand %p199, %p200
    %p202 = pneg %p201
    // Predicated region
    $region9: #{neural_net_with_batchnorm.1} parent=5 // pred_check
      _
    $region10: #{neural_net_with_batchnorm.1} parent=5 // pred_check_branch
      %204 = sbr.rel (%p201) target = $region12
    $region11: #{neural_net_with_batchnorm.1} parent=5 // pred_region
      %s205 = ssub.s32 %s13, 1
      // Predicated region
      $region13: #{neural_net_with_batchnorm.1} parent=11 // pred_check
        %p206 = pneg %p60
      $region14: #{neural_net_with_batchnorm.1} parent=11 // pred_check_branch
        %208 = sbr.rel (%p206) target = $region16
      $region15: #{neural_net_with_batchnorm.1} parent=11 // pred_region
        _
      $region16: #{neural_net_with_batchnorm.1} parent=11 // pred_fallthru
        _
      // Predicated region
      $region17: #{neural_net_with_batchnorm.1} parent=11 // pred_check
        %p209 = pneg %p81
      $region18: #{neural_net_with_batchnorm.1} parent=11 // pred_check_branch
        %211 = sbr.rel (%p209) target = $region20
      $region19: #{neural_net_with_batchnorm.1} parent=11 // pred_region
        _
      $region20: #{neural_net_with_batchnorm.1} parent=11 // pred_fallthru
        _
      // Predicated region
      $region21: #{neural_net_with_batchnorm.1} parent=11 // pred_check
        %p212 = pneg %p102
      $region22: #{neural_net_with_batchnorm.1} parent=11 // pred_check_branch
        %214 = sbr.rel (%p212) target = $region24
      $region23: #{neural_net_with_batchnorm.1} parent=11 // pred_region
        _
      $region24: #{neural_net_with_batchnorm.1} parent=11 // pred_fallthru
        _
      // Predicated region
      $region25: #{neural_net_with_batchnorm.1} parent=11 // pred_check
        %p215 = pneg %p123
      $region26: #{neural_net_with_batchnorm.1} parent=11 // pred_check_branch
        %217 = sbr.rel (%p215) target = $region28
      $region27: #{neural_net_with_batchnorm.1} parent=11 // pred_region
        _
      $region28: #{neural_net_with_batchnorm.1} parent=11 // pred_fallthru
        _
      // Predicated region
      $region29: #{neural_net_with_batchnorm.1} parent=11 // pred_check
        %p218 = pneg %p144
      $region30: #{neural_net_with_batchnorm.1} parent=11 // pred_check_branch
        %220 = sbr.rel (%p218) target = $region32
      $region31: #{neural_net_with_batchnorm.1} parent=11 // pred_region
        _
      $region32: #{neural_net_with_batchnorm.1} parent=11 // pred_fallthru
        _
      // Predicated region
      $region33: #{neural_net_with_batchnorm.1} parent=11 // pred_check
        %p221 = pneg %p165
      $region34: #{neural_net_with_batchnorm.1} parent=11 // pred_check_branch
        %223 = sbr.rel (%p221) target = $region36
      $region35: #{neural_net_with_batchnorm.1} parent=11 // pred_region
        _
      $region36: #{neural_net_with_batchnorm.1} parent=11 // pred_fallthru
        _
    $region12: #{neural_net_with_batchnorm.1} parent=5 // pred_fallthru
      _
    %p224 = scmp.lt.s32.totalorder %s13, 2
    // Predicated region
    $region37: #{neural_net_with_batchnorm.1} parent=5 // pred_check
      %p225 = pneg %p224
    $region38: #{neural_net_with_batchnorm.1} parent=5 // pred_check_branch
      %227 = sbr.rel (%p225) target = $region40
    $region39: #{neural_net_with_batchnorm.1} parent=5 // pred_region
      // Predicated region
      $region41: #{neural_net_with_batchnorm.1} parent=39 // pred_check
        %p228 = pneg %p33
      $region42: #{neural_net_with_batchnorm.1} parent=39 // pred_check_branch
        %230 = sbr.rel (%p228) target = $region44
      $region43: #{neural_net_with_batchnorm.1} parent=39 // pred_region
        %s231 = smul.u32 2, %s13
        %p232 = scmp.lt.s32.totalorder %s231, 3
        %s233 = scalar_select %p232, %s231, 3
        %s234 = smul.addr %s233, 7
        %s235 = smul.addr %s234, 8
        %s236 = scalar_lea.vmem %s0, %s235
        %s237 = smul.u32 2, %s13
      $region44: #{neural_net_with_batchnorm.1} parent=39 // pred_fallthru
        _
    $region40: #{neural_net_with_batchnorm.1} parent=5 // pred_fallthru
      _
    %p238 = scmp.le.s32.totalorder 1, %s13
    %p239 = scmp.lt.s32.totalorder %s13, 3
    %p240 = pnand %p238, %p239
    %p241 = pneg %p240
    // Predicated region
    $region45: #{neural_net_with_batchnorm.1} parent=5 // pred_check
      _
    $region46: #{neural_net_with_batchnorm.1} parent=5 // pred_check_branch
      %243 = sbr.rel (%p240) target = $region48
    $region47: #{neural_net_with_batchnorm.1} parent=5 // pred_region
      %s244 = ssub.s32 %s13, 1
      %s245 = smul.u32 2, %s18
      %p246 = scmp.lt.s32.totalorder %s245, 3
      %s247 = scalar_select %p246, %s245, 3
      %s248 = smul.addr %s247, 7
      %s249 = smul.addr %s248, 8
      %s250 = scalar_lea.vmem %s0, %s249
      %p251 = pneg %p39
      %p252 = pneg %p36
      %p253 = pneg %p60
      %p254 = pneg %p57
      %p255 = pneg %p81
      %p256 = pneg %p78
      %p257 = pneg %p102
      %p258 = pneg %p99
      %p259 = pneg %p123
      %p260 = pneg %p120
      %p261 = pneg %p144
      %p262 = pneg %p141
      %p263 = pneg %p165
      %p264 = pneg %p162
      %p265 = pneg %p191
      %p266 = pneg %p188
      %s267 = smul.u32 2, %s18
      %p268 = scmp.lt.s32.totalorder %s267, 3
      %s269 = scalar_select %p268, %s267, 3
      %s270 = smul.addr %s269, 4
      %s271 = scalar_lea.vmem %s7, %s270
      %s272 = smul.u32 2, %s18
      %p273 = scmp.lt.s32.totalorder %s272, 3
      %s274 = scalar_select %p273, %s272, 3
      %s275 = smul.addr %s274, 7
      %s276 = smul.addr %s275, 8
      %s277 = scalar_lea.vmem %s0, %s276
      %s278 = smul.u32 2, %s18
      %s279 = smul.u32 2, %s18
      %p280 = scmp.lt.s32.totalorder %s279, 3
      %s281 = scalar_select %p280, %s279, 3
      %s282 = smul.addr %s281, 4
      %s283 = scalar_lea.vmem %s7, %s282
      %s284 = smul.u32 2, %s18
      %v286 = vld [vmem:[%s277] sm:$0xff]
      %v287 = vld [vmem:[%s277 + $0x8] sm:$0xff]
      %v288 = vld [vmem:[%s277 + $0x10] sm:$0xff]
      %v289 = vld [vmem:[%s277 + $0x18] sm:$0xff]
      %v290 = vld [vmem:[%s277 + $0x20] sm:$0xff]
      %v291 = vld [vmem:[%s277 + $0x28] sm:$0xff]
      %v292 = vld [vmem:[%s277 + $0x30] sm:$0xff]
      %v293 = vld [vmem:[%s277 + $0x38] sm:$0xff]
      %v294 = vld [vmem:[%s277 + $0x40] sm:$0xff]
      %v295 = vld [vmem:[%s277 + $0x48] sm:$0xff]
      %v296 = vld [vmem:[%s277 + $0x50] sm:$0xff]
      %v297 = vld [vmem:[%s277 + $0x58] sm:$0xff]
      %v298 = vld [vmem:[%s277 + $0x60] sm:$0xff]
      %v299 = vld [vmem:[%s277 + $0x68] sm:$0xff]
      %v300 = vpack.c.bf16 %v293, %v286
      %v301 = vpack.c.bf16 %v294, %v287
      %v302 = vpack.c.bf16 %v295, %v288
      %v303 = vpack.c.bf16 %v296, %v289
      %v304 = vpack.c.bf16 %v297, %v290
      %v305 = vpack.c.bf16 %v298, %v291
      %v306 = vpack.c.bf16 %v299, %v292
      %v307 = vld [vmem:[%s1] sm:$0xf]
      %v308 = vld [vmem:[%s1 + $0x4] sm:$0xf]
      %v309 = vld [vmem:[%s1 + $0x8] sm:$0xf]
      %v310 = vld [vmem:[%s1 + $0xc] sm:$0xf]
      %v311 = vld [vmem:[%s1 + $0x10] sm:$0xf]
      %v312 = vld [vmem:[%s1 + $0x14] sm:$0xf]
      %v313 = vld [vmem:[%s1 + $0x18] sm:$0xf]
      %v314 = vld [vmem:[%s1 + $0x1c] sm:$0xf]
      %v315 = vld [vmem:[%s1 + $0x20] sm:$0xf]
      %v316 = vld [vmem:[%s1 + $0x24] sm:$0xf]
      %v317 = vld [vmem:[%s1 + $0x28] sm:$0xf]
      %v318 = vld [vmem:[%s1 + $0x2c] sm:$0xf]
      %v319 = vld [vmem:[%s1 + $0x30] sm:$0xf]
      %v320 = vld [vmem:[%s1 + $0x34] sm:$0xf]
      %v321 = vld [vmem:[%s1 + $0x38] sm:$0xf]
      %v322 = vld [vmem:[%s1 + $0x3c] sm:$0xf]
      %v323 = vld [vmem:[%s1 + $0x40] sm:$0xf]
      %v324 = vld [vmem:[%s1 + $0x44] sm:$0xf]
      %v325 = vld [vmem:[%s1 + $0x48] sm:$0xf]
      %v326 = vld [vmem:[%s1 + $0x4c] sm:$0xf]
      %v327 = vld [vmem:[%s1 + $0x50] sm:$0xf]
      %v328 = vld [vmem:[%s1 + $0x54] sm:$0xf]
      %v329 = vld [vmem:[%s1 + $0x58] sm:$0xf]
      %v330 = vld [vmem:[%s1 + $0x5c] sm:$0xf]
      %v331 = vld [vmem:[%s1 + $0x60] sm:$0xf]
      %v332 = vld [vmem:[%s1 + $0x64] sm:$0xf]
      %v333 = vld [vmem:[%s1 + $0x68] sm:$0xf]
      %v334 = vld [vmem:[%s1 + $0x6c] sm:$0xf]
      %v335 = vld [vmem:[%s1 + $0x70] sm:$0xf]
      %v336 = vld [vmem:[%s1 + $0x74] sm:$0xf]
      %v337 = vld [vmem:[%s1 + $0x78] sm:$0xf]
      %v338 = vld [vmem:[%s1 + $0x7c] sm:$0xf]
      %v339 = vld [vmem:[%s1 + $0x80] sm:$0xf]
      %v340 = vld [vmem:[%s1 + $0x84] sm:$0xf]
      %v341 = vld [vmem:[%s1 + $0x88] sm:$0xf]
      %v342 = vld [vmem:[%s1 + $0x8c] sm:$0xf]
      %v343 = vld [vmem:[%s1 + $0x90] sm:$0xf]
      %v344 = vld [vmem:[%s1 + $0x94] sm:$0xf]
      %v345 = vld [vmem:[%s1 + $0x98] sm:$0xf]
      %v346 = vld [vmem:[%s1 + $0x9c] sm:$0xf]
      %v347 = vld [vmem:[%s1 + $0xa0] sm:$0xf]
      %v348 = vld [vmem:[%s1 + $0xa4] sm:$0xf]
      %v349 = vld [vmem:[%s1 + $0xa8] sm:$0xf]
      %v350 = vld [vmem:[%s1 + $0xac] sm:$0xf]
      %v351 = vld [vmem:[%s1 + $0xb0] sm:$0xf]
      %v352 = vld [vmem:[%s1 + $0xb4] sm:$0xf]
      %v353 = vld [vmem:[%s1 + $0xb8] sm:$0xf]
      %v354 = vld [vmem:[%s1 + $0xbc] sm:$0xf]
      %v355 = vld [vmem:[%s1 + $0xc0] sm:$0xf]
      %v356 = vld [vmem:[%s1 + $0xc4] sm:$0xf]
      %v357 = vld [vmem:[%s1 + $0xc8] sm:$0xf]
      %v358 = vld [vmem:[%s1 + $0xcc] sm:$0xf]
      %v359 = vld [vmem:[%s1 + $0xd0] sm:$0xf]
      %v360 = vld [vmem:[%s1 + $0xd4] sm:$0xf]
      %v361 = vld [vmem:[%s1 + $0xd8] sm:$0xf]
      %v362 = vld [vmem:[%s1 + $0xdc] sm:$0xf]
      %v363 = vld [vmem:[%s1 + $0xe0] sm:$0xf]
      %v364 = vld [vmem:[%s1 + $0xe4] sm:$0xf]
      %v365 = vld [vmem:[%s1 + $0xe8] sm:$0xf]
      %v366 = vld [vmem:[%s1 + $0xec] sm:$0xf]
      %v367 = vld [vmem:[%s1 + $0xf0] sm:$0xf]
      %v368 = vld [vmem:[%s1 + $0xf4] sm:$0xf]
      %v369 = vld [vmem:[%s1 + $0xf8] sm:$0xf]
      %v370 = vld [vmem:[%s1 + $0xfc] sm:$0xf]
      %v371 = vld [vmem:[%s1 + $0x100] sm:$0xf]
      %v372 = vld [vmem:[%s1 + $0x104] sm:$0xf]
      %v373 = vld [vmem:[%s1 + $0x108] sm:$0xf]
      %v374 = vld [vmem:[%s1 + $0x10c] sm:$0xf]
      %v375 = vld [vmem:[%s1 + $0x110] sm:$0xf]
      %v376 = vld [vmem:[%s1 + $0x114] sm:$0xf]
      %v377 = vld [vmem:[%s1 + $0x118] sm:$0xf]
      %v378 = vld [vmem:[%s1 + $0x11c] sm:$0xf]
      %v379 = vld [vmem:[%s1 + $0x120] sm:$0xf]
      %v380 = vld [vmem:[%s1 + $0x124] sm:$0xf]
      %v381 = vld [vmem:[%s1 + $0x128] sm:$0xf]
      %v382 = vld [vmem:[%s1 + $0x12c] sm:$0xf]
      %v383 = vld [vmem:[%s1 + $0x130] sm:$0xf]
      %v384 = vld [vmem:[%s1 + $0x134] sm:$0xf]
      %v385 = vld [vmem:[%s1 + $0x138] sm:$0xf]
      %v386 = vld [vmem:[%s1 + $0x13c] sm:$0xf]
      %v387 = vld [vmem:[%s1 + $0x140] sm:$0xf]
      %v388 = vld [vmem:[%s1 + $0x144] sm:$0xf]
      %v389 = vld [vmem:[%s1 + $0x148] sm:$0xf]
      %v390 = vld [vmem:[%s1 + $0x14c] sm:$0xf]
      %v391 = vld [vmem:[%s1 + $0x150] sm:$0xf]
      %v392 = vld [vmem:[%s1 + $0x154] sm:$0xf]
      %v393 = vld [vmem:[%s1 + $0x158] sm:$0xf]
      %v394 = vld [vmem:[%s1 + $0x15c] sm:$0xf]
      %v395 = vld [vmem:[%s1 + $0x160] sm:$0xf]
      %v396 = vld [vmem:[%s1 + $0x164] sm:$0xf]
      %v397 = vld [vmem:[%s1 + $0x168] sm:$0xf]
      %v398 = vld [vmem:[%s1 + $0x16c] sm:$0xf]
      %v399 = vld [vmem:[%s1 + $0x170] sm:$0xf]
      %v400 = vld [vmem:[%s1 + $0x174] sm:$0xf]
      %v401 = vld [vmem:[%s1 + $0x178] sm:$0xf]
      %v402 = vld [vmem:[%s1 + $0x17c] sm:$0xf]
      %v403 = vld [vmem:[%s1 + $0x180] sm:$0xf]
      %v404 = vld [vmem:[%s1 + $0x184] sm:$0xf]
      %v405 = vld [vmem:[%s2] sm:$0x1]
      %v407 = vperm.slane %v405, 0
      %v507 = vunpack.c.l.b16 %v307
      %v508 = vunpack.c.l.b16 %v308
      %v509 = vunpack.c.l.b16 %v309
      %v510 = vunpack.c.l.b16 %v310
      %v511 = vunpack.c.l.b16 %v311
      %v512 = vunpack.c.l.b16 %v312
      %v513 = vunpack.c.l.b16 %v313
      %v514 = vunpack.c.l.b16 %v314
      %v515 = vunpack.c.l.b16 %v315
      %v516 = vunpack.c.l.b16 %v316
      %v517 = vunpack.c.l.b16 %v317
      %v518 = vunpack.c.l.b16 %v318
      %v519 = vunpack.c.l.b16 %v319
      %v520 = vunpack.c.l.b16 %v320
      %v521 = vunpack.c.l.b16 %v321
      %v522 = vunpack.c.l.b16 %v322
      %v523 = vunpack.c.l.b16 %v323
      %v524 = vunpack.c.l.b16 %v324
      %v525 = vunpack.c.l.b16 %v325
      %v526 = vunpack.c.l.b16 %v326
      %v527 = vunpack.c.l.b16 %v327
      %v528 = vunpack.c.l.b16 %v328
      %v529 = vunpack.c.l.b16 %v329
      %v530 = vunpack.c.l.b16 %v330
      %v531 = vunpack.c.l.b16 %v331
      %v532 = vunpack.c.l.b16 %v332
      %v533 = vunpack.c.l.b16 %v333
      %v534 = vunpack.c.l.b16 %v334
      %v535 = vunpack.c.l.b16 %v335
      %v536 = vunpack.c.l.b16 %v336
      %v537 = vunpack.c.l.b16 %v337
      %v538 = vunpack.c.l.b16 %v338
      %v539 = vunpack.c.l.b16 %v339
      %v540 = vunpack.c.l.b16 %v340
      %v541 = vunpack.c.l.b16 %v341
      %v542 = vunpack.c.l.b16 %v342
      %v543 = vunpack.c.l.b16 %v343
      %v544 = vunpack.c.l.b16 %v344
      %v545 = vunpack.c.l.b16 %v345
      %v546 = vunpack.c.l.b16 %v346
      %v547 = vunpack.c.l.b16 %v347
      %v548 = vunpack.c.l.b16 %v348
      %v549 = vunpack.c.l.b16 %v349
      %v550 = vunpack.c.l.b16 %v350
      %v551 = vunpack.c.l.b16 %v351
      %v552 = vunpack.c.l.b16 %v352
      %v553 = vunpack.c.l.b16 %v353
      %v554 = vunpack.c.l.b16 %v354
      %v555 = vunpack.c.l.b16 %v355
      %v556 = vunpack.c.l.b16 %v356
      %v557 = vunpack.c.l.b16 %v357
      %v558 = vunpack.c.l.b16 %v358
      %v559 = vunpack.c.l.b16 %v359
      %v560 = vunpack.c.l.b16 %v360
      %v561 = vunpack.c.l.b16 %v361
      %v562 = vunpack.c.l.b16 %v362
      %v563 = vunpack.c.l.b16 %v363
      %v564 = vunpack.c.l.b16 %v364
      %v565 = vunpack.c.l.b16 %v365
      %v566 = vunpack.c.l.b16 %v366
      %v567 = vunpack.c.l.b16 %v367
      %v568 = vunpack.c.l.b16 %v368
      %v569 = vunpack.c.l.b16 %v369
      %v570 = vunpack.c.l.b16 %v370
      %v571 = vunpack.c.l.b16 %v371
      %v572 = vunpack.c.l.b16 %v372
      %v573 = vunpack.c.l.b16 %v373
      %v574 = vunpack.c.l.b16 %v374
      %v575 = vunpack.c.l.b16 %v375
      %v576 = vunpack.c.l.b16 %v376
      %v577 = vunpack.c.l.b16 %v377
      %v578 = vunpack.c.l.b16 %v378
      %v579 = vunpack.c.l.b16 %v379
      %v580 = vunpack.c.l.b16 %v380
      %v581 = vunpack.c.l.b16 %v381
      %v582 = vunpack.c.l.b16 %v382
      %v583 = vunpack.c.l.b16 %v383
      %v584 = vunpack.c.l.b16 %v384
      %v585 = vunpack.c.l.b16 %v385
      %v586 = vunpack.c.l.b16 %v386
      %v587 = vunpack.c.l.b16 %v387
      %v588 = vunpack.c.l.b16 %v388
      %v589 = vunpack.c.l.b16 %v389
      %v590 = vunpack.c.l.b16 %v390
      %v591 = vunpack.c.l.b16 %v391
      %v592 = vunpack.c.l.b16 %v392
      %v593 = vunpack.c.l.b16 %v393
      %v594 = vunpack.c.l.b16 %v394
      %v595 = vunpack.c.l.b16 %v395
      %v596 = vunpack.c.l.b16 %v396
      %v597 = vunpack.c.l.b16 %v397
      %v598 = vunpack.c.l.b16 %v398
      %v599 = vunpack.c.l.b16 %v399
      %v600 = vunpack.c.l.b16 %v400
      %v601 = vunpack.c.l.b16 %v401
      %v602 = vunpack.c.l.b16 %v402
      %v603 = vunpack.c.l.b16 %v403
      %v604 = vunpack.c.l.b16 %v404
      %v605 = vpack.c.b16 %v508, %v507
      %v606 = vpack.c.b16 %v510, %v509
      %v607 = vpack.c.b16 %v512, %v511
      %v608 = vpack.c.b16 %v514, %v513
      %v609 = vpack.c.b16 %v516, %v515
      %v610 = vpack.c.b16 %v518, %v517
      %v611 = vpack.c.b16 %v520, %v519
      %v612 = vpack.c.b16 %v522, %v521
      %v613 = vpack.c.b16 %v524, %v523
      %v614 = vpack.c.b16 %v526, %v525
      %v615 = vpack.c.b16 %v528, %v527
      %v616 = vpack.c.b16 %v530, %v529
      %v617 = vpack.c.b16 %v532, %v531
      %v618 = vpack.c.b16 %v534, %v533
      %v619 = vpack.c.b16 %v536, %v535
      %v620 = vpack.c.b16 %v538, %v537
      %v621 = vpack.c.b16 %v540, %v539
      %v622 = vpack.c.b16 %v542, %v541
      %v623 = vpack.c.b16 %v544, %v543
      %v624 = vpack.c.b16 %v546, %v545
      %v625 = vpack.c.b16 %v548, %v547
      %v626 = vpack.c.b16 %v550, %v549
      %v627 = vpack.c.b16 %v552, %v551
      %v628 = vpack.c.b16 %v554, %v553
      %v629 = vpack.c.b16 %v556, %v555
      %v630 = vpack.c.b16 %v558, %v557
      %v631 = vpack.c.b16 %v560, %v559
      %v632 = vpack.c.b16 %v562, %v561
      %v633 = vpack.c.b16 %v564, %v563
      %v634 = vpack.c.b16 %v566, %v565
      %v635 = vpack.c.b16 %v568, %v567
      %v636 = vpack.c.b16 %v570, %v569
      %v637 = vpack.c.b16 %v572, %v571
      %v638 = vpack.c.b16 %v574, %v573
      %v639 = vpack.c.b16 %v576, %v575
      %v640 = vpack.c.b16 %v578, %v577
      %v641 = vpack.c.b16 %v580, %v579
      %v642 = vpack.c.b16 %v582, %v581
      %v643 = vpack.c.b16 %v584, %v583
      %v644 = vpack.c.b16 %v586, %v585
      %v645 = vpack.c.b16 %v588, %v587
      %v646 = vpack.c.b16 %v590, %v589
      %v647 = vpack.c.b16 %v592, %v591
      %v648 = vpack.c.b16 %v594, %v593
      %v649 = vpack.c.b16 %v596, %v595
      %v650 = vpack.c.b16 %v598, %v597
      %v651 = vpack.c.b16 %v600, %v599
      %v652 = vpack.c.b16 %v602, %v601
      %v653 = vpack.c.b16 %v604, %v603
      %vm703 = vcmask 130048
      %v705 = vsel %vm703, %v306, 0
      %707 = vmatpush.bf16.msra.mxu0 %v612
      %708 = vmatpush.bf16.msra.mxu0 %v611
      %709 = vmatpush.bf16.msra.mxu0 %v610
      %710 = vmatpush.bf16.msra.mxu0 %v609
      %711 = vmatpush.bf16.msra.mxu0 %v608
      %712 = vmatpush.bf16.msra.mxu0 %v607
      %713 = vmatpush.bf16.msra.mxu0 %v606
      %714 = vmatpush.bf16.msra.mxu0 %v605
      %715 = vmatmul.bf16.gmra.mxu0 %v300
      %v716 = vpop.f32.mrf.mxu0
      %v717 = vadd.f32 %v407, %v716
      %v718 = vpop.f32.mrf.mxu0
      %v719 = vadd.f32 %v407, %v718
      %720 = vdwg.mxu0
      %721 = vmatpush.bf16.msra.mxu0 %v620
      %722 = vmatpush.bf16.msra.mxu0 %v619
      %723 = vmatpush.bf16.msra.mxu0 %v618
      %724 = vmatpush.bf16.msra.mxu0 %v617
      %725 = vmatpush.bf16.msra.mxu0 %v616
      %726 = vmatpush.bf16.msra.mxu0 %v615
      %727 = vmatpush.bf16.msra.mxu0 %v614
      %728 = vmatpush.bf16.msra.mxu0 %v613
      %729 = vmatmul.bf16.gmra.mxu0 %v301
      %v730 = vpop.f32.mrf.mxu0
      %v731 = vadd.f32 %v717, %v730
      %v732 = vpop.f32.mrf.mxu0
      %v733 = vadd.f32 %v719, %v732
      %734 = vdwg.mxu0
      %735 = vmatpush.bf16.msra.mxu0 %v628
      %736 = vmatpush.bf16.msra.mxu0 %v627
      %737 = vmatpush.bf16.msra.mxu0 %v626
      %738 = vmatpush.bf16.msra.mxu0 %v625
      %739 = vmatpush.bf16.msra.mxu0 %v624
      %740 = vmatpush.bf16.msra.mxu0 %v623
      %741 = vmatpush.bf16.msra.mxu0 %v622
      %742 = vmatpush.bf16.msra.mxu0 %v621
      %743 = vmatmul.bf16.gmra.mxu0 %v302
      %v744 = vpop.f32.mrf.mxu0
      %v745 = vadd.f32 %v731, %v744
      %v746 = vpop.f32.mrf.mxu0
      %v747 = vadd.f32 %v733, %v746
      %748 = vdwg.mxu0
      %749 = vmatpush.bf16.msra.mxu0 %v636
      %750 = vmatpush.bf16.msra.mxu0 %v635
      %751 = vmatpush.bf16.msra.mxu0 %v634
      %752 = vmatpush.bf16.msra.mxu0 %v633
      %753 = vmatpush.bf16.msra.mxu0 %v632
      %754 = vmatpush.bf16.msra.mxu0 %v631
      %755 = vmatpush.bf16.msra.mxu0 %v630
      %756 = vmatpush.bf16.msra.mxu0 %v629
      %757 = vmatmul.bf16.gmra.mxu0 %v303
      %v758 = vpop.f32.mrf.mxu0
      %v759 = vadd.f32 %v745, %v758
      %v760 = vpop.f32.mrf.mxu0
      %v761 = vadd.f32 %v747, %v760
      %762 = vdwg.mxu0
      %763 = vmatpush.bf16.msra.mxu0 %v644
      %764 = vmatpush.bf16.msra.mxu0 %v643
      %765 = vmatpush.bf16.msra.mxu0 %v642
      %766 = vmatpush.bf16.msra.mxu0 %v641
      %767 = vmatpush.bf16.msra.mxu0 %v640
      %768 = vmatpush.bf16.msra.mxu0 %v639
      %769 = vmatpush.bf16.msra.mxu0 %v638
      %770 = vmatpush.bf16.msra.mxu0 %v637
      %771 = vmatmul.bf16.gmra.mxu0 %v304
      %v772 = vpop.f32.mrf.mxu0
      %v773 = vadd.f32 %v759, %v772
      %v774 = vpop.f32.mrf.mxu0
      %v775 = vadd.f32 %v761, %v774
      %776 = vdwg.mxu0
      %777 = vmatpush.bf16.msra.mxu0 %v652
      %778 = vmatpush.bf16.msra.mxu0 %v651
      %779 = vmatpush.bf16.msra.mxu0 %v650
      %780 = vmatpush.bf16.msra.mxu0 %v649
      %781 = vmatpush.bf16.msra.mxu0 %v648
      %782 = vmatpush.bf16.msra.mxu0 %v647
      %783 = vmatpush.bf16.msra.mxu0 %v646
      %784 = vmatpush.bf16.msra.mxu0 %v645
      %785 = vmatmul.bf16.gmra.mxu0 %v305
      %v786 = vpop.f32.mrf.mxu0
      %v787 = vadd.f32 %v773, %v786
      %v788 = vpop.f32.mrf.mxu0
      %v789 = vadd.f32 %v775, %v788
      %790 = vdwg.mxu0
      %791 = vmatpush.bf16.msra.mxu0 0
      %792 = vmatpush.bf16.msra.mxu0 0
      %793 = vmatpush.bf16.msra.mxu0 0
      %794 = vmatpush.bf16.msra.mxu0 0
      %795 = vmatpush.bf16.msra.mxu0 0
      %796 = vmatpush.bf16.msra.mxu0 0
      %797 = vmatpush.bf16.msra.mxu0 0
      %798 = vmatpush.bf16.msra.mxu0 %v653
      %799 = vmatmul.bf16.gmra.mxu0 %v705
      %v800 = vpop.f32.mrf.mxu0
      %v801 = vadd.f32 %v787, %v800
      %v802 = vpop.f32.mrf.mxu0
      %v803 = vadd.f32 %v789, %v802
      %804 = vdwg.mxu0
      %v805 = vmax.f32 %v801, 0.0
      %v806 = vmax.f32 %v803, 0.0
      %v807 = vpack.c.bf16 %v806, %v805
      %v808 = vld [vmem:[%s3] sm:$0xf]
      %v809 = vld [vmem:[%s3 + $0x4] sm:$0xf]
      %v810 = vld [vmem:[%s3 + $0x8] sm:$0xf]
      %v811 = vld [vmem:[%s3 + $0xc] sm:$0xf]
      %v812 = vld [vmem:[%s3 + $0x10] sm:$0xf]
      %v813 = vld [vmem:[%s3 + $0x14] sm:$0xf]
      %v814 = vld [vmem:[%s3 + $0x18] sm:$0xf]
      %v815 = vld [vmem:[%s3 + $0x1c] sm:$0xf]
      %v816 = vld [vmem:[%s3 + $0x20] sm:$0xf]
      %v817 = vld [vmem:[%s3 + $0x24] sm:$0xf]
      %v818 = vld [vmem:[%s3 + $0x28] sm:$0xf]
      %v819 = vld [vmem:[%s3 + $0x2c] sm:$0xf]
      %v820 = vld [vmem:[%s3 + $0x30] sm:$0xf]
      %v821 = vld [vmem:[%s3 + $0x34] sm:$0xf]
      %v822 = vld [vmem:[%s3 + $0x38] sm:$0xf]
      %v823 = vld [vmem:[%s3 + $0x3c] sm:$0xf]
      %v824 = vld [vmem:[%s4] sm:$0x1]
      %v826 = vperm.slane %v824, 0
      %v844 = vunpack.c.l.b16 %v808
      %v845 = vunpack.c.l.b16 %v809
      %v846 = vunpack.c.l.b16 %v810
      %v847 = vunpack.c.l.b16 %v811
      %v848 = vunpack.c.l.b16 %v812
      %v849 = vunpack.c.l.b16 %v813
      %v850 = vunpack.c.l.b16 %v814
      %v851 = vunpack.c.l.b16 %v815
      %v852 = vunpack.c.l.b16 %v816
      %v853 = vunpack.c.l.b16 %v817
      %v854 = vunpack.c.l.b16 %v818
      %v855 = vunpack.c.l.b16 %v819
      %v856 = vunpack.c.l.b16 %v820
      %v857 = vunpack.c.l.b16 %v821
      %v858 = vunpack.c.l.b16 %v822
      %v859 = vunpack.c.l.b16 %v823
      %v860 = vpack.c.b16 %v845, %v844
      %v861 = vpack.c.b16 %v847, %v846
      %v862 = vpack.c.b16 %v849, %v848
      %v863 = vpack.c.b16 %v851, %v850
      %v864 = vpack.c.b16 %v853, %v852
      %v865 = vpack.c.b16 %v855, %v854
      %v866 = vpack.c.b16 %v857, %v856
      %v867 = vpack.c.b16 %v859, %v858
      %876 = vmatpush.bf16.msra.mxu0 %v867
      %877 = vmatpush.bf16.msra.mxu0 %v866
      %878 = vmatpush.bf16.msra.mxu0 %v865
      %879 = vmatpush.bf16.msra.mxu0 %v864
      %880 = vmatpush.bf16.msra.mxu0 %v863
      %881 = vmatpush.bf16.msra.mxu0 %v862
      %882 = vmatpush.bf16.msra.mxu0 %v861
      %883 = vmatpush.bf16.msra.mxu0 %v860
      %884 = vmatmul.bf16.gmra.mxu0 %v807
      %v885 = vpop.f32.mrf.mxu0
      %v886 = vadd.f32 %v826, %v885
      %v887 = vpop.f32.mrf.mxu0
      %v888 = vadd.f32 %v826, %v887
      %889 = vdwg.mxu0
      %v890 = vmax.f32 %v886, 0.0
      %v891 = vmax.f32 %v888, 0.0
      %v892 = vpack.c.bf16 %v891, %v890
      %v893 = vld [vmem:[%s5] sm:$0xf]
      %v894 = vld [vmem:[%s5 + $0x4] sm:$0xf]
      %v895 = vld [vmem:[%s5 + $0x8] sm:$0xf]
      %v896 = vld [vmem:[%s5 + $0xc] sm:$0xf]
      %v897 = vld [vmem:[%s5 + $0x10] sm:$0xf]
      %v898 = vld [vmem:[%s5 + $0x14] sm:$0xf]
      %v899 = vld [vmem:[%s5 + $0x18] sm:$0xf]
      %v900 = vld [vmem:[%s5 + $0x1c] sm:$0xf]
      %v901 = vld [vmem:[%s5 + $0x20] sm:$0xf]
      %v902 = vld [vmem:[%s5 + $0x24] sm:$0xf]
      %v903 = vld [vmem:[%s5 + $0x28] sm:$0xf]
      %v904 = vld [vmem:[%s5 + $0x2c] sm:$0xf]
      %v905 = vld [vmem:[%s5 + $0x30] sm:$0xf]
      %v906 = vld [vmem:[%s5 + $0x34] sm:$0xf]
      %v907 = vld [vmem:[%s5 + $0x38] sm:$0xf]
      %v908 = vld [vmem:[%s5 + $0x3c] sm:$0xf]
      %v909 = vld [vmem:[%s6] sm:$0x1]
      %v911 = vperm.slane %v909, 0
      %v929 = vunpack.c.l.b16 %v893
      %v930 = vunpack.c.l.b16 %v894
      %v931 = vunpack.c.l.b16 %v895
      %v932 = vunpack.c.l.b16 %v896
      %v933 = vunpack.c.l.b16 %v897
      %v934 = vunpack.c.l.b16 %v898
      %v935 = vunpack.c.l.b16 %v899
      %v936 = vunpack.c.l.b16 %v900
      %v937 = vunpack.c.l.b16 %v901
      %v938 = vunpack.c.l.b16 %v902
      %v939 = vunpack.c.l.b16 %v903
      %v940 = vunpack.c.l.b16 %v904
      %v941 = vunpack.c.l.b16 %v905
      %v942 = vunpack.c.l.b16 %v906
      %v943 = vunpack.c.l.b16 %v907
      %v944 = vunpack.c.l.b16 %v908
      %v945 = vpack.c.b16 %v930, %v929
      %v946 = vpack.c.b16 %v932, %v931
      %v947 = vpack.c.b16 %v934, %v933
      %v948 = vpack.c.b16 %v936, %v935
      %v949 = vpack.c.b16 %v938, %v937
      %v950 = vpack.c.b16 %v940, %v939
      %v951 = vpack.c.b16 %v942, %v941
      %v952 = vpack.c.b16 %v944, %v943
      %961 = vmatpush.bf16.msra.mxu0 %v952
      %962 = vmatpush.bf16.msra.mxu0 %v951
      %963 = vmatpush.bf16.msra.mxu0 %v950
      %964 = vmatpush.bf16.msra.mxu0 %v949
      %965 = vmatpush.bf16.msra.mxu0 %v948
      %966 = vmatpush.bf16.msra.mxu0 %v947
      %967 = vmatpush.bf16.msra.mxu0 %v946
      %968 = vmatpush.bf16.msra.mxu0 %v945
      %969 = vmatmul.bf16.gmra.mxu0 %v892
      %v970 = vpop.f32.mrf.mxu0
      %v971 = vadd.f32 %v911, %v970
      %v972 = vpop.f32.mrf.mxu0
      %v973 = vadd.f32 %v911, %v972
      %974 = vdwg.mxu0
      %v975 = vpack.c.bf16 %v971, %v971
      %v976 = vpack.c.bf16 %v973, %v973
      %977 = vst [vmem:[%s283] sm:$0xf] %v975
      %978 = vst [vmem:[%s283 + $0x4] sm:$0xf] %v976
      %s979 = smul.u32 2, %s18
      %p980 = scmp.lt.s32.totalorder %s979, 3
      %s981 = scalar_select %p980, %s979, 3
      %s982 = smul.addr %s981, 4
      %s983 = scalar_lea.vmem %s7, %s982
      // Predicated region
      $region49: #{neural_net_with_batchnorm.1} parent=47 // pred_check
        %p984 = pneg %p188
      $region50: #{neural_net_with_batchnorm.1} parent=47 // pred_check_branch
        %986 = sbr.rel (%p984) target = $region52
      $region51: #{neural_net_with_batchnorm.1} parent=47 // pred_region
        %s987 = smul.u32 2, %s18
      $region52: #{neural_net_with_batchnorm.1} parent=47 // pred_fallthru
        _
    $region48: #{neural_net_with_batchnorm.1} parent=5 // pred_fallthru
      _
    %p988 = scmp.le.s32.totalorder 2, %s13
    // Predicated region
    $region53: #{neural_net_with_batchnorm.1} parent=5 // pred_check
      %p989 = pneg %p988
    $region54: #{neural_net_with_batchnorm.1} parent=5 // pred_check_branch
      %991 = sbr.rel (%p989) target = $region56
    $region55: #{neural_net_with_batchnorm.1} parent=5 // pred_region
      %s992 = ssub.s32 %s13, 2
      // Predicated region
      $region57: #{neural_net_with_batchnorm.1} parent=55 // pred_check
        %p993 = pneg %p194
      $region58: #{neural_net_with_batchnorm.1} parent=55 // pred_check_branch
        %995 = sbr.rel (%p993) target = $region60
      $region59: #{neural_net_with_batchnorm.1} parent=55 // pred_region
        %s996 = smul.u32 2, %s19
        %p997 = scmp.lt.s32.totalorder %s996, 3
        %s998 = scalar_select %p997, %s996, 3
        %s999 = smul.addr %s998, 4
        %s1000 = scalar_lea.vmem %s7, %s999
      $region60: #{neural_net_with_batchnorm.1} parent=55 // pred_fallthru
        _
    $region56: #{neural_net_with_batchnorm.1} parent=5 // pred_fallthru
      _
  $region6: #{neural_net_with_batchnorm.1} parent=0 // loop_footer
    %s17 = sadd.s32 1, %s13
  $region7: #{neural_net_with_batchnorm.1} parent=0 // loop_footer_branch
    %12 = sbr.rel target = $region3
  $region8: #{neural_net_with_batchnorm.1} parent=0 // loop_exit
    _

</llo_original>
